<compile_context>
chip_gen: v7x
topology: tpu7x:2x2x1
jax: 0.10.0
libtpu: 0.0.40
codegen_flags: <defaults>
</compile_context>

<pallas_src>
import math
from functools import partial

import jax
import jax.numpy as jnp
from jax.experimental import pallas as pl
from jax.experimental.pallas import tpu as pltpu

NEAR_INF = 1e20  # ParlAI's NEAR_INF


# --------------------------------------------------------------------------- #
# Kernel
# --------------------------------------------------------------------------- #
def _attention_kernel(dec_out_ref, dec_hid_ref, enc_ref, mask_ref, *rest,
                      use_linear_in, num_kv_tiles, tile_s):
    if use_linear_in:
        (w_in_ref, w_out_dec_ref, w_out_mix_ref,
         out_ref, attn_ref, hid_sc, m_sc, l_sc, acc_sc) = rest
    else:
        (w_out_dec_ref, w_out_mix_ref,
         out_ref, attn_ref, hid_sc, m_sc, l_sc, acc_sc) = rest

    j = pl.program_id(1)

    def init():
        # hid = linear_in(decoder_hidden[-1]) ('general') / identity ('dot'),
        # computed once per batch tile (the kv axis revisits the same block).
        if use_linear_in:
            hid_sc[...] = jnp.dot(dec_hid_ref[...], w_in_ref[...],
                                  preferred_element_type=jnp.float32)
        else:
            hid_sc[...] = dec_hid_ref[...].astype(jnp.float32)
        m_sc[...] = jnp.full(m_sc.shape, -jnp.inf, jnp.float32)
        l_sc[...] = jnp.zeros(l_sc.shape, jnp.float32)
        acc_sc[...] = jnp.zeros(acc_sc.shape, jnp.float32)

    if num_kv_tiles == 1:
        init()
    else:
        pl.when(j == 0)(init)

    # Score / softmax math stays f32 even when inputs stream in as bf16.
    enc = enc_ref[...].astype(jnp.float32)        # (TB, TS, H)
    hid = hid_sc[...]                             # (TB, H)  f32

    # attention_scores: q=1, so use VPU multiply + lane reduce (not the MXU).
    s = jnp.sum(enc * hid[:, None, :], axis=-1)   # (TB, TS)
    # masked_fill_(1 - attention_mask, -NEAR_INF)
    s = jnp.where(mask_ref[...] != 0, s, jnp.float32(-NEAR_INF))

    # Stash raw masked scores in the VMEM-resident attention-weight block so
    # the finalize step can emit exact softmax weights without a second pass.
    if num_kv_tiles == 1:
        attn_ref[...] = s
    else:
        off = pl.multiple_of(j * tile_s, tile_s)
        attn_ref[:, pl.ds(off, tile_s)] = s

    # Online-softmax accumulation of mix = softmax(scores) @ encoder_output.
    m_prev = m_sc[...]
    m_new = jnp.maximum(m_prev, jnp.max(s, axis=-1, keepdims=True))
    alpha = jnp.exp(m_prev - m_new)
    p = jnp.exp(s - m_new)                                           # (TB, TS)
    l_sc[...] = alpha * l_sc[...] + jnp.sum(p, axis=-1, keepdims=True)
    acc_sc[...] = alpha * acc_sc[...] + jnp.sum(p[:, :, None] * enc, axis=1)
    m_sc[...] = m_new

    def finalize():
        inv_l = pl.reciprocal(l_sc[...], approx=True)                # EUP slot
        # exact softmax weights from the stashed scores
        weights = jnp.exp(attn_ref[...] - m_sc[...]) * inv_l
        attn_ref[...] = weights.astype(attn_ref.dtype)
        mix = acc_sc[...] * inv_l                                    # (TB, H)

        # output = tanh(linear_out(cat([decoder_output, mix], dim=1)))
        #        = tanh(dec_out @ Wa + mix @ Wb)     (split weight -> no concat)
        out = (jnp.dot(dec_out_ref[...], w_out_dec_ref[...],
                       preferred_element_type=jnp.float32)
               + jnp.dot(mix.astype(w_out_mix_ref.dtype), w_out_mix_ref[...],
                         preferred_element_type=jnp.float32))
        out_ref[...] = jnp.tanh(out).astype(out_ref.dtype)

    if num_kv_tiles == 1:
        finalize()
    else:
        pl.when(j == num_kv_tiles - 1)(finalize)


# --------------------------------------------------------------------------- #
# Tiling / VMEM heuristics
# --------------------------------------------------------------------------- #
def _pick_kv_tile(S):
    # enc block's 2nd-minor dim must be 8-aligned and the mask block's lane dim
    # must be 128-aligned (or span full S) -> only split S on 128-multiples.
    if S % 128 == 0:
        for ts in (512, 256, 128):
            if S % ts == 0:
                return ts, S // ts
    return S, 1


def _vmem_footprint_bytes(tile_b, tile_s, S, H, enc_itemsize, w_itemsize,
                          out_itemsize, n_weights):
    enc_blk = 2 * tile_b * tile_s * H * enc_itemsize        # double-buffered
    mask_blk = 2 * tile_b * tile_s * 4
    dec_blk = 2 * 2 * tile_b * H * enc_itemsize             # dec_out + dec_hid
    w_blk = 2 * n_weights * H * H * w_itemsize              # resident weights
    out_blk = 2 * (tile_b * H * out_itemsize + tile_b * S * 4)
    scratch = tile_b * (2 * H + 2) * 4
    return enc_blk + mask_blk + dec_blk + w_blk + out_blk + scratch


def _pick_batch_tile(B, S, tile_s, H, enc_itemsize, w_itemsize, out_itemsize,
                     n_weights, budget_bytes=24 * 1024 * 1024):
    # Legal batch tiles: multiples of 8 dividing B, or B itself (block 2nd-minor
    # dims must be 8-aligned or span the whole axis).  Budget sized so the
    # working set leaves headroom even on v7x's 64 MiB VMEM.
    candidates = sorted({B} | {t for t in range(8, B + 1, 8) if B % t == 0},
                        reverse=True)
    chosen = candidates[-1]
    for tb in candidates:
        if B >= 16 and tb == B:
            continue  # keep >= 2 grid steps so both v7x TensorCores get work
        if _vmem_footprint_bytes(tb, tile_s, S, H, enc_itemsize, w_itemsize,
                                 out_itemsize, n_weights) <= budget_bytes:
            chosen = tb
            break
    return chosen


# --------------------------------------------------------------------------- #
# Wrapper
# --------------------------------------------------------------------------- #
def prepare_attention_params(w_out, w_in=None):
    """Transpose/split the nn.Linear weights ONCE (outside any decode loop).

    w_in  : torch layout (H, H)   -> w_in_t (H, H)          (x @ W^T)
    w_out : torch layout (H, 2H)  -> split into two (H, H) halves so that
            linear_out(cat([dec_out, mix])) = dec_out @ Wa + mix @ Wb.
    """
    w_out = jnp.asarray(w_out)
    H = w_out.shape[0]
    w_out_t = w_out.T
    params = {'w_out_dec': w_out_t[:H], 'w_out_mix': w_out_t[H:]}
    if w_in is not None:
        params['w_in_t'] = jnp.asarray(w_in).T
    return params


def ibm_attention_forward(decoder_output, decoder_hidden, encoder_output,
                          attention_mask, params, attention_type='general'):
    if attention_type not in ('dot', 'general'):
        raise ValueError('Invalid attention type selected.')
    B, S, H = encoder_output.shape

    # Dtype-preserving: no wrapper-side upcast (bf16 inputs stream as bf16;
    # softmax math is upcast to f32 inside the kernel).
    dec_out = decoder_output.reshape(B, H)
    dec_hid = decoder_hidden[-1] if decoder_hidden.ndim == 3 else decoder_hidden
    mask = attention_mask.astype(jnp.int32)

    use_linear_in = attention_type == 'general'
    n_weights = 3 if use_linear_in else 2
    w_out_dec, w_out_mix = params['w_out_dec'], params['w_out_mix']

    enc_itemsize = jnp.dtype(encoder_output.dtype).itemsize
    w_itemsize = jnp.dtype(w_out_dec.dtype).itemsize
    out_itemsize = jnp.dtype(decoder_output.dtype).itemsize

    tile_s, num_kv = _pick_kv_tile(S)
    tile_b = _pick_batch_tile(B, S, tile_s, H, enc_itemsize, w_itemsize,
                              out_itemsize, n_weights)
    grid = (B // tile_b, num_kv)

    footprint = _vmem_footprint_bytes(tile_b, tile_s, S, H, enc_itemsize,
                                      w_itemsize, out_itemsize, n_weights)
    vmem_limit = int(min(max(2 * footprint, 32 * 1024 * 1024),
                         64 * 1024 * 1024))

    row2d = lambda i, j: (i, 0)
    enc_map = lambda i, j: (i, j, 0)
    mask_map = lambda i, j: (i, j)
    resident = lambda i, j: (0, 0)   # weights never re-DMA across grid steps

    in_specs = [
        pl.BlockSpec((tile_b, H), row2d),            # decoder_output (squeezed)
        pl.BlockSpec((tile_b, H), row2d),            # decoder_hidden[-1]
        pl.BlockSpec((tile_b, tile_s, H), enc_map),  # encoder_output kv tile
        pl.BlockSpec((tile_b, tile_s), mask_map),    # attention_mask kv tile
    ]
    args = [dec_out, dec_hid, encoder_output, mask]
    if use_linear_in:
        in_specs.append(pl.BlockSpec((H, H), resident))
        args.append(params['w_in_t'])
    in_specs += [pl.BlockSpec((H, H), resident),
                 pl.BlockSpec((H, H), resident)]
    args += [w_out_dec, w_out_mix]

    out_shapes = (jax.ShapeDtypeStruct((B, H), decoder_output.dtype),
                  jax.ShapeDtypeStruct((B, S), jnp.float32))
    out_specs = (pl.BlockSpec((tile_b, H), row2d),
                 pl.BlockSpec((tile_b, S), row2d))   # full S, resident over kv

    scratch_shapes = [
        pltpu.VMEM((tile_b, H), jnp.float32),   # hid = linear_in(dec_hid)
        pltpu.VMEM((tile_b, 1), jnp.float32),   # running max
        pltpu.VMEM((tile_b, 1), jnp.float32),   # running denominator
        pltpu.VMEM((tile_b, H), jnp.float32),   # mix accumulator
    ]

    out, attn = pl.pallas_call(
        partial(_attention_kernel, use_linear_in=use_linear_in,
                num_kv_tiles=num_kv, tile_s=tile_s),
        grid=grid,
        in_specs=in_specs,
        out_specs=out_specs,
        out_shape=out_shapes,
        scratch_shapes=scratch_shapes,
        compiler_params=pltpu.CompilerParams(
            dimension_semantics=("parallel", "arbitrary"),
            vmem_limit_bytes=vmem_limit),
    )(*args)

    # forward() returns (output.unsqueeze(1), attention_weights)
    return out.reshape(B, 1, H), attn


# --------------------------------------------------------------------------- #
# Pure-JAX reference (attention_type='general')
# --------------------------------------------------------------------------- #
def reference_forward(decoder_output, decoder_hidden, encoder_output,
                      attention_mask, w_in, w_out):
    B, S, H = encoder_output.shape
    hid = decoder_hidden[-1] @ w_in.T
    scores = jnp.einsum('bh,bsh->bs', hid, encoder_output)
    scores = jnp.where(attention_mask != 0, scores, -NEAR_INF)
    weights = jax.nn.softmax(scores, axis=-1)
    mix = jnp.einsum('bs,bsh->bh', weights, encoder_output)
    combined = jnp.concatenate([decoder_output.reshape(B, H), mix], axis=-1)
    out = jnp.tanh(combined @ w_out.T)
    return out.reshape(B, 1, H), weights


if __name__ == "__main__":
    key = jax.random.PRNGKey(0)
    k_do, k_dh, k_eo, k_wi, k_wo = jax.random.split(key, 5)

    B, S, H, L = 2, 8, 32, 2   # batch, enc seq len, hidden dim, decoder layers

    decoder_output = jax.random.normal(k_do, (B, 1, H), jnp.float32)
    decoder_hidden = jax.random.normal(k_dh, (L, B, H), jnp.float32)
    encoder_output = jax.random.normal(k_eo, (B, S, H), jnp.float32)

    attention_mask = jnp.ones((B, S), jnp.int32)
    attention_mask = attention_mask.at[1, -3:].set(0)   # padded tail on row 1

    # nn.Linear(bias=False) default init ~ U(-1/sqrt(fan_in), 1/sqrt(fan_in))
    w_in = jax.random.uniform(k_wi, (H, H), jnp.float32,
                              -1.0 / math.sqrt(H), 1.0 / math.sqrt(H))
    w_out = jax.random.uniform(k_wo, (H, 2 * H), jnp.float32,
                               -1.0 / math.sqrt(2 * H), 1.0 / math.sqrt(2 * H))

    # ---- f32 run (weight transposes hoisted out of the per-step call) ------
    params = prepare_attention_params(w_out, w_in)
    out, attn = ibm_attention_forward(decoder_output, decoder_hidden,
                                      encoder_output, attention_mask,
                                      params, attention_type='general')
    out, attn = jax.block_until_ready((out, attn))

    assert out.shape == (B, 1, H), out.shape
    assert attn.shape == (B, S), attn.shape
    assert bool(jnp.all(jnp.isfinite(out))) and bool(jnp.all(jnp.isfinite(attn)))

    ref_out, ref_attn = reference_forward(decoder_output, decoder_hidden,
                                          encoder_output, attention_mask,
                                          w_in, w_out)
    assert jnp.allclose(out, ref_out, atol=1e-2, rtol=1e-2)
    assert jnp.allclose(attn, ref_attn, atol=1e-2, rtol=1e-2)
    assert bool(jnp.all(attn[1, -3:] < 1e-6))   # masked positions ~0 weight

    # ---- bf16 run: inputs/weights stream as bf16, softmax math in f32 ------
    do_bf = decoder_output.astype(jnp.bfloat16)
    dh_bf = decoder_hidden.astype(jnp.bfloat16)
    eo_bf = encoder_output.astype(jnp.bfloat16)
    params_bf = prepare_attention_params(w_out.astype(jnp.bfloat16),
                                         w_in.astype(jnp.bfloat16))
    out_bf, attn_bf = ibm_attention_forward(do_bf, dh_bf, eo_bf,
                                            attention_mask, params_bf,
                                            attention_type='general')
    out_bf, attn_bf = jax.block_until_ready((out_bf, attn_bf))

    ref_out_bf, ref_attn_bf = reference_forward(
        do_bf.astype(jnp.float32), dh_bf.astype(jnp.float32),
        eo_bf.astype(jnp.float32), attention_mask,
        w_in.astype(jnp.bfloat16).astype(jnp.float32),
        w_out.astype(jnp.bfloat16).astype(jnp.float32))
    assert out_bf.dtype == jnp.bfloat16
    assert jnp.allclose(out_bf.astype(jnp.float32), ref_out_bf, atol=1e-1)
    assert jnp.allclose(attn_bf, ref_attn_bf, atol=1e-1)
    assert bool(jnp.all(attn_bf[1, -3:] < 1e-6))

    print("KERNEL_OK")
</pallas_src>

<mosaic_0001>
module attributes {stable_mosaic.version = 11 : i64} {
  func.func @_attention_kernel(%arg0: i32, %arg1: i32, %arg2: memref<2x32xf32, #tpu.memory_space<vmem>>, %arg3: memref<2x32xf32, #tpu.memory_space<vmem>>, %arg4: memref<2x8x32xf32, #tpu.memory_space<vmem>>, %arg5: memref<2x8xi32, #tpu.memory_space<vmem>>, %arg6: memref<32x32xf32, #tpu.memory_space<vmem>>, %arg7: memref<32x32xf32, #tpu.memory_space<vmem>>, %arg8: memref<32x32xf32, #tpu.memory_space<vmem>>, %arg9: memref<2x32xf32, #tpu.memory_space<vmem>>, %arg10: memref<2x8xf32, #tpu.memory_space<vmem>>, %arg11: memref<2x32xf32, #tpu.memory_space<vmem>>, %arg12: memref<2x1xf32, #tpu.memory_space<vmem>>, %arg13: memref<2x1xf32, #tpu.memory_space<vmem>>, %arg14: memref<2x32xf32, #tpu.memory_space<vmem>>) attributes {dimension_semantics = [#tpu.dimension_semantics<parallel>, #tpu.dimension_semantics<arbitrary>], iteration_bounds = array<i64: 1, 1>, scalar_prefetch = 0 : i64, scratch_operands = 4 : i64, tpu.core_type = #tpu.core_type<tc>, window_params = [{transform_indices = @transform_0, window_bounds = array<i64: 2, 32>}, {transform_indices = @transform_1, window_bounds = array<i64: 2, 32>}, {transform_indices = @transform_2, window_bounds = array<i64: 2, 8, 32>}, {transform_indices = @transform_3, window_bounds = array<i64: 2, 8>}, {pipeline_mode = #tpu.pipeline_mode<synchronous>, transform_indices = @transform_4, window_bounds = array<i64: 32, 32>}, {pipeline_mode = #tpu.pipeline_mode<synchronous>, transform_indices = @transform_5, window_bounds = array<i64: 32, 32>}, {pipeline_mode = #tpu.pipeline_mode<synchronous>, transform_indices = @transform_6, window_bounds = array<i64: 32, 32>}, {transform_indices = @transform_7, window_bounds = array<i64: 2, 32>}, {transform_indices = @transform_8, window_bounds = array<i64: 2, 8>}]} {
    %c0 = arith.constant 0 : index
    %c0_0 = arith.constant 0 : index
    %0 = vector.load %arg3[%c0, %c0_0] : memref<2x32xf32, #tpu.memory_space<vmem>>, vector<2x32xf32>
    %c0_1 = arith.constant 0 : index
    %c0_2 = arith.constant 0 : index
    %1 = vector.load %arg6[%c0_1, %c0_2] : memref<32x32xf32, #tpu.memory_space<vmem>>, vector<32x32xf32>
    %cst = arith.constant dense<0.000000e+00> : vector<2x32xf32>
    %2 = tpu.matmul %0, %1, %cst {dimension_numbers = #tpu.dot_dimension_numbers<[1], [0], [0], [1], [0, 0, 1, 1], [], []>} : vector<2x32xf32>, vector<32x32xf32>, vector<2x32xf32> -> vector<2x32xf32>
    %c0_3 = arith.constant 0 : index
    %c0_4 = arith.constant 0 : index
    %3 = vector.load %arg11[%c0_3, %c0_4] : memref<2x32xf32, #tpu.memory_space<vmem>>, vector<2x32xf32>
    tpu.vector_store %arg11[%c0_3, %c0_4], %2 {strides = array<i32>} : memref<2x32xf32, #tpu.memory_space<vmem>>, vector<2x32xf32>,
    %cst_5 = arith.constant 0xFF800000 : f32
    %4 = vector.broadcast %cst_5 : f32 to vector<2x1xf32>
    %c0_6 = arith.constant 0 : index
    %c0_7 = arith.constant 0 : index
    %5 = vector.load %arg12[%c0_6, %c0_7] : memref<2x1xf32, #tpu.memory_space<vmem>>, vector<2x1xf32>
    tpu.vector_store %arg12[%c0_6, %c0_7], %4 {strides = array<i32>} : memref<2x1xf32, #tpu.memory_space<vmem>>, vector<2x1xf32>,
    %cst_8 = arith.constant 0.000000e+00 : f32
    %6 = vector.broadcast %cst_8 : f32 to vector<2x1xf32>
    %c0_9 = arith.constant 0 : index
    %c0_10 = arith.constant 0 : index
    %7 = vector.load %arg13[%c0_9, %c0_10] : memref<2x1xf32, #tpu.memory_space<vmem>>, vector<2x1xf32>
    tpu.vector_store %arg13[%c0_9, %c0_10], %6 {strides = array<i32>} : memref<2x1xf32, #tpu.memory_space<vmem>>, vector<2x1xf32>,
    %cst_11 = arith.constant 0.000000e+00 : f32
    %8 = vector.broadcast %cst_11 : f32 to vector<2x32xf32>
    %c0_12 = arith.constant 0 : index
    %c0_13 = arith.constant 0 : index
    %9 = vector.load %arg14[%c0_12, %c0_13] : memref<2x32xf32, #tpu.memory_space<vmem>>, vector<2x32xf32>
    tpu.vector_store %arg14[%c0_12, %c0_13], %8 {strides = array<i32>} : memref<2x32xf32, #tpu.memory_space<vmem>>, vector<2x32xf32>,
    %c0_14 = arith.constant 0 : index
    %c0_15 = arith.constant 0 : index
    %c0_16 = arith.constant 0 : index
    %10 = vector.load %arg4[%c0_14, %c0_15, %c0_16] : memref<2x8x32xf32, #tpu.memory_space<vmem>>, vector<2x8x32xf32>
    %c0_17 = arith.constant 0 : index
    %c0_18 = arith.constant 0 : index
    %11 = vector.load %arg11[%c0_17, %c0_18] : memref<2x32xf32, #tpu.memory_space<vmem>>, vector<2x32xf32>
    %12 = vector.shape_cast %11 : vector<2x32xf32> to vector<2x1x32xf32>
    %13 = vector.broadcast %12 : vector<2x1x32xf32> to vector<2x8x32xf32>
    %14 = arith.mulf %10, %13 : vector<2x8x32xf32>
    %cst_19 = arith.constant dense<0.000000e+00> : vector<2x8xf32>
    %15 = vector.multi_reduction <add>, %14, %cst_19 [2] : vector<2x8x32xf32> to vector<2x8xf32>
    %c0_20 = arith.constant 0 : index
    %c0_21 = arith.constant 0 : index
    %16 = vector.load %arg5[%c0_20, %c0_21] : memref<2x8xi32, #tpu.memory_space<vmem>>, vector<2x8xi32>
    %c0_i32 = arith.constant 0 : i32
    %17 = vector.broadcast %c0_i32 : i32 to vector<2x8xi32>
    %18 = arith.cmpi ne, %16, %17 : vector<2x8xi32>
    %cst_22 = arith.constant -1.000000e+20 : f32
    %19 = vector.broadcast %cst_22 : f32 to vector<2x8xf32>
    %20 = arith.select %18, %15, %19 : vector<2x8xi1>, vector<2x8xf32>
    %c0_23 = arith.constant 0 : index
    %c0_24 = arith.constant 0 : index
    %21 = vector.load %arg10[%c0_23, %c0_24] : memref<2x8xf32, #tpu.memory_space<vmem>>, vector<2x8xf32>
    tpu.vector_store %arg10[%c0_23, %c0_24], %20 {strides = array<i32>} : memref<2x8xf32, #tpu.memory_space<vmem>>, vector<2x8xf32>,
    %c0_25 = arith.constant 0 : index
    %c0_26 = arith.constant 0 : index
    %22 = vector.load %arg12[%c0_25, %c0_26] : memref<2x1xf32, #tpu.memory_space<vmem>>, vector<2x1xf32>
    %cst_27 = arith.constant dense<0xFF800000> : vector<2xf32>
    %23 = vector.multi_reduction <maximumf>, %20, %cst_27 [1] : vector<2x8xf32> to vector<2xf32>
    %24 = vector.shape_cast %23 : vector<2xf32> to vector<2x1xf32>
    %25 = arith.maximumf %22, %24 : vector<2x1xf32>
    %26 = arith.subf %22, %25 : vector<2x1xf32>
    %27 = math.exp %26 : vector<2x1xf32>
    %28 = vector.broadcast %25 : vector<2x1xf32> to vector<2x8xf32>
    %29 = arith.subf %20, %28 : vector<2x8xf32>
    %30 = math.exp %29 : vector<2x8xf32>
    %c0_28 = arith.constant 0 : index
    %c0_29 = arith.constant 0 : index
    %31 = vector.load %arg13[%c0_28, %c0_29] : memref<2x1xf32, #tpu.memory_space<vmem>>, vector<2x1xf32>
    %32 = arith.mulf %27, %31 : vector<2x1xf32>
    %cst_30 = arith.constant dense<0.000000e+00> : vector<2xf32>
    %33 = vector.multi_reduction <add>, %30, %cst_30 [1] : vector<2x8xf32> to vector<2xf32>
    %34 = vector.shape_cast %33 : vector<2xf32> to vector<2x1xf32>
    %35 = arith.addf %32, %34 : vector<2x1xf32>
    %c0_31 = arith.constant 0 : index
    %c0_32 = arith.constant 0 : index
    %36 = vector.load %arg13[%c0_31, %c0_32] : memref<2x1xf32, #tpu.memory_space<vmem>>, vector<2x1xf32>
    tpu.vector_store %arg13[%c0_31, %c0_32], %35 {strides = array<i32>} : memref<2x1xf32, #tpu.memory_space<vmem>>, vector<2x1xf32>,
    %c0_33 = arith.constant 0 : index
    %c0_34 = arith.constant 0 : index
    %37 = vector.load %arg14[%c0_33, %c0_34] : memref<2x32xf32, #tpu.memory_space<vmem>>, vector<2x32xf32>
    %38 = vector.broadcast %27 : vector<2x1xf32> to vector<2x32xf32>
    %39 = arith.mulf %38, %37 : vector<2x32xf32>
    %40 = vector.shape_cast %30 : vector<2x8xf32> to vector<2x8x1xf32>
    %41 = vector.broadcast %40 : vector<2x8x1xf32> to vector<2x8x32xf32>
    %42 = arith.mulf %41, %10 : vector<2x8x32xf32>
    %cst_35 = arith.constant dense<0.000000e+00> : vector<2x32xf32>
    %43 = vector.multi_reduction <add>, %42, %cst_35 [1] : vector<2x8x32xf32> to vector<2x32xf32>
    %44 = arith.addf %39, %43 : vector<2x32xf32>
    %c0_36 = arith.constant 0 : index
    %c0_37 = arith.constant 0 : index
    %45 = vector.load %arg14[%c0_36, %c0_37] : memref<2x32xf32, #tpu.memory_space<vmem>>, vector<2x32xf32>
    tpu.vector_store %arg14[%c0_36, %c0_37], %44 {strides = array<i32>} : memref<2x32xf32, #tpu.memory_space<vmem>>, vector<2x32xf32>,
    %c0_38 = arith.constant 0 : index
    %c0_39 = arith.constant 0 : index
    %46 = vector.load %arg12[%c0_38, %c0_39] : memref<2x1xf32, #tpu.memory_space<vmem>>, vector<2x1xf32>
    tpu.vector_store %arg12[%c0_38, %c0_39], %25 {strides = array<i32>} : memref<2x1xf32, #tpu.memory_space<vmem>>, vector<2x1xf32>,
    %c0_40 = arith.constant 0 : index
    %c0_41 = arith.constant 0 : index
    %47 = vector.load %arg13[%c0_40, %c0_41] : memref<2x1xf32, #tpu.memory_space<vmem>>, vector<2x1xf32>
    %48 = tpu.reciprocal %47 {approx = true} : vector<2x1xf32> -> vector<2x1xf32>
    %c0_42 = arith.constant 0 : index
    %c0_43 = arith.constant 0 : index
    %49 = vector.load %arg10[%c0_42, %c0_43] : memref<2x8xf32, #tpu.memory_space<vmem>>, vector<2x8xf32>
    %c0_44 = arith.constant 0 : index
    %c0_45 = arith.constant 0 : index
    %50 = vector.load %arg12[%c0_44, %c0_45] : memref<2x1xf32, #tpu.memory_space<vmem>>, vector<2x1xf32>
    %51 = vector.broadcast %50 : vector<2x1xf32> to vector<2x8xf32>
    %52 = arith.subf %49, %51 : vector<2x8xf32>
    %53 = math.exp %52 : vector<2x8xf32>
    %54 = vector.broadcast %48 : vector<2x1xf32> to vector<2x8xf32>
    %55 = arith.mulf %53, %54 : vector<2x8xf32>
    %c0_46 = arith.constant 0 : index
    %c0_47 = arith.constant 0 : index
    %56 = vector.load %arg10[%c0_46, %c0_47] : memref<2x8xf32, #tpu.memory_space<vmem>>, vector<2x8xf32>
    tpu.vector_store %arg10[%c0_46, %c0_47], %55 {strides = array<i32>} : memref<2x8xf32, #tpu.memory_space<vmem>>, vector<2x8xf32>,
    %c0_48 = arith.constant 0 : index
    %c0_49 = arith.constant 0 : index
    %57 = vector.load %arg14[%c0_48, %c0_49] : memref<2x32xf32, #tpu.memory_space<vmem>>, vector<2x32xf32>
    %58 = vector.broadcast %48 : vector<2x1xf32> to vector<2x32xf32>
    %59 = arith.mulf %57, %58 : vector<2x32xf32>
    %c0_50 = arith.constant 0 : index
    %c0_51 = arith.constant 0 : index
    %60 = vector.load %arg2[%c0_50, %c0_51] : memref<2x32xf32, #tpu.memory_space<vmem>>, vector<2x32xf32>
    %c0_52 = arith.constant 0 : index
    %c0_53 = arith.constant 0 : index
    %61 = vector.load %arg7[%c0_52, %c0_53] : memref<32x32xf32, #tpu.memory_space<vmem>>, vector<32x32xf32>
    %cst_54 = arith.constant dense<0.000000e+00> : vector<2x32xf32>
    %62 = tpu.matmul %60, %61, %cst_54 {dimension_numbers = #tpu.dot_dimension_numbers<[1], [0], [0], [1], [0, 0, 1, 1], [], []>} : vector<2x32xf32>, vector<32x32xf32>, vector<2x32xf32> -> vector<2x32xf32>
    %c0_55 = arith.constant 0 : index
    %c0_56 = arith.constant 0 : index
    %63 = vector.load %arg8[%c0_55, %c0_56] : memref<32x32xf32, #tpu.memory_space<vmem>>, vector<32x32xf32>
    %cst_57 = arith.constant dense<0.000000e+00> : vector<2x32xf32>
    %64 = tpu.matmul %59, %63, %cst_57 {dimension_numbers = #tpu.dot_dimension_numbers<[1], [0], [0], [1], [0, 0, 1, 1], [], []>} : vector<2x32xf32>, vector<32x32xf32>, vector<2x32xf32> -> vector<2x32xf32>
    %65 = arith.addf %62, %64 : vector<2x32xf32>
    %66 = math.tanh %65 : vector<2x32xf32>
    %c0_58 = arith.constant 0 : index
    %c0_59 = arith.constant 0 : index
    %67 = vector.load %arg9[%c0_58, %c0_59] : memref<2x32xf32, #tpu.memory_space<vmem>>, vector<2x32xf32>
    tpu.vector_store %arg9[%c0_58, %c0_59], %66 {strides = array<i32>} : memref<2x32xf32, #tpu.memory_space<vmem>>, vector<2x32xf32>,
    return
  }
  func.func @transform_0(%arg0: i32, %arg1: i32) -> (i32, i32) {
    %c0_i32 = arith.constant 0 : i32
    %c0_i32_0 = arith.constant 0 : i32
    return %arg0, %c0_i32 : i32, i32
  }
  func.func @transform_1(%arg0: i32, %arg1: i32) -> (i32, i32) {
    %c0_i32 = arith.constant 0 : i32
    %c0_i32_0 = arith.constant 0 : i32
    return %arg0, %c0_i32 : i32, i32
  }
  func.func @transform_2(%arg0: i32, %arg1: i32) -> (i32, i32, i32) {
    %c0_i32 = arith.constant 0 : i32
    %c0_i32_0 = arith.constant 0 : i32
    return %arg0, %arg1, %c0_i32 : i32, i32, i32
  }
  func.func @transform_3(%arg0: i32, %arg1: i32) -> (i32, i32) {
    %c0_i32 = arith.constant 0 : i32
    return %arg0, %arg1 : i32, i32
  }
  func.func @transform_4(%arg0: i32, %arg1: i32) -> (i32, i32) {
    %c0_i32 = arith.constant 0 : i32
    %c0_i32_0 = arith.constant 0 : i32
    %c0_i32_1 = arith.constant 0 : i32
    return %c0_i32, %c0_i32_0 : i32, i32
  }
  func.func @transform_5(%arg0: i32, %arg1: i32) -> (i32, i32) {
    %c0_i32 = arith.constant 0 : i32
    %c0_i32_0 = arith.constant 0 : i32
    %c0_i32_1 = arith.constant 0 : i32
    return %c0_i32, %c0_i32_0 : i32, i32
  }
  func.func @transform_6(%arg0: i32, %arg1: i32) -> (i32, i32) {
    %c0_i32 = arith.constant 0 : i32
    %c0_i32_0 = arith.constant 0 : i32
    %c0_i32_1 = arith.constant 0 : i32
    return %c0_i32, %c0_i32_0 : i32, i32
  }
  func.func @transform_7(%arg0: i32, %arg1: i32) -> (i32, i32) {
    %c0_i32 = arith.constant 0 : i32
    %c0_i32_0 = arith.constant 0 : i32
    return %arg0, %c0_i32 : i32, i32
  }
  func.func @transform_8(%arg0: i32, %arg1: i32) -> (i32, i32) {
    %c0_i32 = arith.constant 0 : i32
    %c0_i32_0 = arith.constant 0 : i32
    return %arg0, %c0_i32 : i32, i32
  }
}

</mosaic_0001>

<llo_original>
// kernel: tpu_custom_call.1
$region0: #{tpu_custom_call.1}
  #allocation0 [shape = 'u32[]', space=smem, size = 0x4, offset = 0x4, fixed_abs, tag = 'smem constant byte address 0x4 - core index']
  #allocation1 [shape = 'u32[144,128]{1,0:T(1,128)}', space=vmem, size = 0x12000, scoped, tag = 'internal scratch']
  #allocation2 [shape = 'f32[2,32]{1,0:T(2,128)}', space=vmem, size = 0x400, scoped, tag = 'scratch operand']
  #allocation3 [shape = 'f32[2,1]{1,0:T(2,128)}', space=vmem, size = 0x400, scoped, tag = 'scratch operand']
  #allocation4 [shape = 'f32[2,1]{1,0:T(2,128)}', space=vmem, size = 0x400, scoped, tag = 'scratch operand']
  #allocation5 [shape = 'f32[2,32]{1,0:T(2,128)}', space=vmem, size = 0x400, scoped, tag = 'scratch operand']
  %s0 = inlined_call_operand.hbm [shape: f32[2,32], index: 0, kind: input, shape index: {}]
  %s1 = inlined_call_operand.vmem [shape: f32[2,32], index: 1, kind: input, shape index: {}]
  %s2 = inlined_call_operand.hbm [shape: f32[2,8,32], index: 2, kind: input, shape index: {}]
  %s3 = inlined_call_operand.vmem [shape: s32[2,8], index: 3, kind: input, shape index: {}]
  %s4 = inlined_call_operand.hbm [shape: f32[32,32], index: 4, kind: input, shape index: {}]
  %s5 = inlined_call_operand.hbm [shape: f32[32,32], index: 5, kind: input, shape index: {}]
  %s6 = inlined_call_operand.hbm [shape: f32[32,32], index: 6, kind: input, shape index: {}]
  %s7 = inlined_call_operand.hbm [shape: f32[2,32], index: 7, kind: output, shape index: {0}]
  %s8 = inlined_call_operand.hbm [shape: f32[2,8], index: 8, kind: output, shape index: {1}]
  %9 = xla_tuple %s7, %s8
  %s10 = sld [smem:[#allocation0]]
  $region66: #{tpu_custom_call.1} parent=0
    _
  %s12 = ssub.s32 1, %s10
  %s13 = scalar_select 0, %s12, %s10
  $region1: #{tpu_custom_call.1} parent=0
    #allocation6 [shape = 'u8[1024]{0}', space=vmem, size = 0x400, scoped, tag = 'input window, operand 0, single buffered']
    #allocation7 [shape = 's32[1]{0}', space=sflag, size = 0x4, scoped, tag = 'scoped memory for tpu_custom_call.1']
    #allocation8 [shape = 's32[1]{0}', space=sflag, size = 0x4, scoped, tag = 'scoped memory for tpu_custom_call.1']
    #allocation9 [shape = 'u8[8192]{0}', space=vmem, size = 0x2000, scoped, tag = 'input window, operand 2, single buffered']
    #allocation10 [shape = 's32[1]{0}', space=sflag, size = 0x4, scoped, tag = 'scoped memory for tpu_custom_call.1']
    #allocation11 [shape = 'u8[16384]{0}', space=vmem, size = 0x4000, scoped, tag = 'input window, operand 4, single buffered']
    #allocation12 [shape = 'u8[16384]{0}', space=vmem, size = 0x4000, scoped, tag = 'input window, operand 5, single buffered']
    #allocation13 [shape = 's32[1]{0}', space=sflag, size = 0x4, scoped, tag = 'scoped memory for tpu_custom_call.1']
    #allocation14 [shape = 'u8[16384]{0}', space=vmem, size = 0x4000, scoped, tag = 'input window, operand 6, single buffered']
    #allocation15 [shape = 'u8[1024]{0}', space=vmem, size = 0x400, scoped, tag = 'output window, operand 0, single buffered']
    #allocation16 [shape = 'u8[1024]{0}', space=vmem, size = 0x400, scoped, tag = 'output window, operand 1, single buffered']
    #allocation17 [shape = 's32[1]{0}', space=sflag, size = 0x4, scoped, tag = 'scoped memory for tpu_custom_call.1']
    %14 = vsyncpa [#allocation7], 0
    %15 = vsyncpa [#allocation10], 0
    %16 = vsyncpa [#allocation13], 0
    %17 = vsyncpa [#allocation8], 0
    %18 = vsyncpa [#allocation17], 0
    // Predicated region
    $region2: #{tpu_custom_call.1} parent=1 // pred_check
      _
    $region3: #{tpu_custom_call.1} parent=1 // pred_check_branch
      %20 = sbr.rel (0) target = $region5
    $region4: #{tpu_custom_call.1} parent=1 // pred_region
      %s22 = ssub.s32 32, 32
      %23 = vsyncadd [#allocation7], %s22
      %s25 = sshll.u32 [#allocation6], 4
      %s26 = int_to_ptr.vmem [resolvable:$true] %s25
      %28 = dma.hbm_to_vmem [thread:$0]  %s0, 32, %s26, [#allocation7]
    $region5: #{tpu_custom_call.1} parent=1 // pred_fallthru
      _
    // Predicated region
    $region6: #{tpu_custom_call.1} parent=1 // pred_check
      _
    $region7: #{tpu_custom_call.1} parent=1 // pred_check_branch
      %30 = sbr.rel (0) target = $region9
    $region8: #{tpu_custom_call.1} parent=1 // pred_region
      _
    $region9: #{tpu_custom_call.1} parent=1 // pred_fallthru
      _
    // Predicated region
    $region10: #{tpu_custom_call.1} parent=1 // pred_check
      _
    $region11: #{tpu_custom_call.1} parent=1 // pred_check_branch
      %32 = sbr.rel (0) target = $region13
    $region12: #{tpu_custom_call.1} parent=1 // pred_region
      %s34 = ssub.s32 256, 256
      %35 = vsyncadd [#allocation10], %s34
      %s36 = sshll.u32 [#allocation9], 4
      %s37 = int_to_ptr.vmem [resolvable:$true] %s36
      %42 = dma.hbm_to_vmem [thread:$0]  %s2, 256, %s37, [#allocation10], 128, 128, 8
    $region13: #{tpu_custom_call.1} parent=1 // pred_fallthru
      _
    // Predicated region
    $region14: #{tpu_custom_call.1} parent=1 // pred_check
      _
    $region15: #{tpu_custom_call.1} parent=1 // pred_check_branch
      %44 = sbr.rel (0) target = $region17
    $region16: #{tpu_custom_call.1} parent=1 // pred_region
      _
    $region17: #{tpu_custom_call.1} parent=1 // pred_fallthru
      _
    // Predicated region
    $region18: #{tpu_custom_call.1} parent=1 // pred_check
      _
    $region19: #{tpu_custom_call.1} parent=1 // pred_check_branch
      %46 = sbr.rel (0) target = $region21
    $region20: #{tpu_custom_call.1} parent=1 // pred_region
      %s48 = ssub.s32 512, 512
      %49 = vsyncadd [#allocation10], %s48
      %s50 = sshll.u32 [#allocation11], 4
      %s51 = int_to_ptr.vmem [resolvable:$true] %s50
      %56 = dma.hbm_to_vmem [thread:$0]  %s4, 512, %s51, [#allocation10], 128, 128, 8
    $region21: #{tpu_custom_call.1} parent=1 // pred_fallthru
      _
    // Predicated region
    $region22: #{tpu_custom_call.1} parent=1 // pred_check
      _
    $region23: #{tpu_custom_call.1} parent=1 // pred_check_branch
      %58 = sbr.rel (0) target = $region25
    $region24: #{tpu_custom_call.1} parent=1 // pred_region
      %s60 = ssub.s32 512, 512
      %61 = vsyncadd [#allocation13], %s60
      %s62 = sshll.u32 [#allocation12], 4
      %s63 = int_to_ptr.vmem [resolvable:$true] %s62
      %68 = dma.hbm_to_vmem [thread:$0]  %s5, 512, %s63, [#allocation13], 128, 128, 8
    $region25: #{tpu_custom_call.1} parent=1 // pred_fallthru
      _
    // Predicated region
    $region26: #{tpu_custom_call.1} parent=1 // pred_check
      _
    $region27: #{tpu_custom_call.1} parent=1 // pred_check_branch
      %70 = sbr.rel (0) target = $region29
    $region28: #{tpu_custom_call.1} parent=1 // pred_region
      %s72 = ssub.s32 512, 512
      %73 = vsyncadd [#allocation13], %s72
      %s74 = sshll.u32 [#allocation14], 4
      %s75 = int_to_ptr.vmem [resolvable:$true] %s74
      %80 = dma.hbm_to_vmem [thread:$0]  %s6, 512, %s75, [#allocation13], 128, 128, 8
    $region29: #{tpu_custom_call.1} parent=1 // pred_fallthru
      _
    // Predicated region
    $region30: #{tpu_custom_call.1} parent=1 // pred_check
      _
    $region31: #{tpu_custom_call.1} parent=1 // pred_check_branch
      %82 = sbr.rel (0) target = $region33
    $region32: #{tpu_custom_call.1} parent=1 // pred_region
      %83 = dma.done [#allocation7], 32
    $region33: #{tpu_custom_call.1} parent=1 // pred_fallthru
      _
    // Predicated region
    $region34: #{tpu_custom_call.1} parent=1 // pred_check
      _
    $region35: #{tpu_custom_call.1} parent=1 // pred_check_branch
      %85 = sbr.rel (0) target = $region37
    $region36: #{tpu_custom_call.1} parent=1 // pred_region
      %86 = dma.done [#allocation10], 256
    $region37: #{tpu_custom_call.1} parent=1 // pred_fallthru
      _
    // Predicated region
    $region38: #{tpu_custom_call.1} parent=1 // pred_check
      _
    $region39: #{tpu_custom_call.1} parent=1 // pred_check_branch
      %88 = sbr.rel (0) target = $region41
    $region40: #{tpu_custom_call.1} parent=1 // pred_region
      %89 = dma.done [#allocation10], 512
    $region41: #{tpu_custom_call.1} parent=1 // pred_fallthru
      _
    // Predicated region
    $region42: #{tpu_custom_call.1} parent=1 // pred_check
      _
    $region43: #{tpu_custom_call.1} parent=1 // pred_check_branch
      %91 = sbr.rel (0) target = $region45
    $region44: #{tpu_custom_call.1} parent=1 // pred_region
      %92 = dma.done [#allocation13], 512
    $region45: #{tpu_custom_call.1} parent=1 // pred_fallthru
      _
    // Predicated region
    $region46: #{tpu_custom_call.1} parent=1 // pred_check
      _
    $region47: #{tpu_custom_call.1} parent=1 // pred_check_branch
      %94 = sbr.rel (0) target = $region49
    $region48: #{tpu_custom_call.1} parent=1 // pred_region
      %95 = dma.done [#allocation13], 512
    $region49: #{tpu_custom_call.1} parent=1 // pred_fallthru
      _
    %v96 = vld [vmem:[%s1] sm:$0x3]
    %v97 = vld [vmem:[#allocation11] sm:$0xff]
    %v98 = vld [vmem:[#allocation11 + $0x8] sm:$0xff]
    %v99 = vld [vmem:[#allocation11 + $0x10] sm:$0xff]
    %v100 = vld [vmem:[#allocation11 + $0x18] sm:$0xff]
    %vm101 = vcmask 261120
    %v103 = vsel %vm101, %v96, 0
    %105 = vmatprep.subr.mxu0 0.0
    %106 = vmatpush1.msra.mxu0 %v97
    %107 = vmatprep.subr.mxu0 0.0
    %108 = vmatpush1.msra.mxu0 %v98
    %109 = vmatprep.subr.mxu0 0.0
    %110 = vmatpush1.msra.mxu0 %v99
    %111 = vmatprep.subr.mxu0 0.0
    %112 = vmatpush1.msra.mxu0 %v100
    %113 = vmatprep.subr.mxu0 0.0
    %114 = vmatpush1.msra.mxu0 0.0
    %115 = vmatprep.subr.mxu0 0.0
    %116 = vmatpush1.msra.mxu0 0.0
    %117 = vmatprep.subr.mxu0 0.0
    %118 = vmatpush1.msra.mxu0 0.0
    %119 = vmatprep.subr.mxu0 0.0
    %120 = vmatpush1.msra.mxu0 0.0
    %121 = vmatprep.subr.mxu0 0.0
    %122 = vmatpush1.msra.mxu0 0.0
    %123 = vmatprep.subr.mxu0 0.0
    %124 = vmatpush1.msra.mxu0 0.0
    %125 = vmatprep.subr.mxu0 0.0
    %126 = vmatpush1.msra.mxu0 0.0
    %127 = vmatprep.subr.mxu0 0.0
    %128 = vmatpush1.msra.mxu0 0.0
    %129 = vmatprep.subr.mxu0 0.0
    %130 = vmatpush1.msra.mxu0 0.0
    %131 = vmatprep.subr.mxu0 0.0
    %132 = vmatpush1.msra.mxu0 0.0
    %133 = vmatprep.subr.mxu0 0.0
    %134 = vmatpush1.msra.mxu0 0.0
    %135 = vmatprep.subr.mxu0 0.0
    %136 = vmatpush1.msra.mxu0 0.0
    %137 = vmatprep.subr.mxu0 0.0
    %138 = vmatpush1.msra.mxu0 0.0
    %139 = vmatprep.subr.mxu0 0.0
    %140 = vmatpush1.msra.mxu0 0.0
    %141 = vmatprep.subr.mxu0 0.0
    %142 = vmatpush1.msra.mxu0 0.0
    %143 = vmatprep.subr.mxu0 0.0
    %144 = vmatpush1.msra.mxu0 0.0
    %145 = vmatprep.subr.mxu0 0.0
    %146 = vmatpush1.msra.mxu0 0.0
    %147 = vmatprep.subr.mxu0 0.0
    %148 = vmatpush1.msra.mxu0 0.0
    %149 = vmatprep.subr.mxu0 0.0
    %150 = vmatpush1.msra.mxu0 0.0
    %151 = vmatprep.subr.mxu0 0.0
    %152 = vmatpush1.msra.mxu0 0.0
    %153 = vmatprep.subr.mxu0 0.0
    %154 = vmatpush1.msra.mxu0 0.0
    %155 = vmatprep.subr.mxu0 0.0
    %156 = vmatpush1.msra.mxu0 0.0
    %157 = vmatprep.subr.mxu0 0.0
    %158 = vmatpush1.msra.mxu0 0.0
    %159 = vmatprep.subr.mxu0 0.0
    %160 = vmatpush1.msra.mxu0 0.0
    %161 = vmatprep.subr.mxu0 0.0
    %162 = vmatpush1.msra.mxu0 0.0
    %163 = vmatprep.subr.mxu0 0.0
    %164 = vmatpush1.msra.mxu0 0.0
    %165 = vmatprep.subr.mxu0 0.0
    %166 = vmatpush1.msra.mxu0 0.0
    %167 = vmatprep.subr.mxu0 0.0
    %168 = vmatpush1.msra.mxu0 0.0
    %169 = vmatprep.mubr.f32.mxu0 0.0
    %170 = vmatmul.mubr.f32.gmra.mrb[0].mxu0 %v103
    %v171 = vpop.f32.mrb[0].mxu0
    %v172 = vadd.f32 0.0, %v171
    %v173 = vpop.f32.mrb[0].mxu0
    %174 = vdwg.mxu0
    %vm175 = vcmask 254976
    %176 = vst.msk [vmem:[#allocation2] sm:$0x3] %vm175, %v172
    %vm177 = vcmask 1024
    %178 = vst.msk [vmem:[#allocation3] sm:$0x3] %vm177, -inf
    %179 = vst.msk [vmem:[#allocation4] sm:$0x3] %vm177, 0.0
    %180 = vst.msk [vmem:[#allocation5] sm:$0x3] %vm175, 0.0
    %v181 = vld [vmem:[#allocation9] sm:$0xff]
    %v182 = vld [vmem:[#allocation9 + $0x8] sm:$0xff]
    %v183 = vld [vmem:[#allocation2] sm:$0x3]
    %v186 = vunpack.c.l.s4 1966171168
    %v187 = vunpack.c.0.s8 %v186
    %v188 = vlaneseq
    %v189 = vshrl.u32 %v188, 7
    %v190 = vsub.s32 %v187, %v189
    %v191 = vrot.slane %v183, %v190
    %v192 = vcombine.high %v191, %v191
    %v194 = vunpack.c.l.s4 1966171168
    %v195 = vunpack.c.0.s8 %v194
    %v196 = vlaneseq
    %v197 = vshrl.u32 %v196, 7
    %v198 = vsub.s32 %v195, %v197
    %v199 = vrot.slane %v191, %v198
    %v201 = vunpack.c.l.s4 1966171168
    %v202 = vunpack.c.0.s8 %v201
    %v203 = vlaneseq
    %v204 = vshrl.u32 %v203, 7
    %v205 = vsub.s32 %v202, %v204
    %v206 = vrot.slane %v192, %v205
    %v207 = vlaneseq
    %v208 = vshrl.u32 %v207, 7
    %v209 = vsub.s32 0, %v208
    %v210 = vrot.slane %v199, %v209
    %v211 = vlaneseq
    %v212 = vshrl.u32 %v211, 7
    %v213 = vsub.s32 0, %v212
    %v214 = vrot.slane %v206, %v213
    %v217 = vmul.f32 %v181, %v210
    %v218 = vmul.f32 %v182, %v214
    %v219 = vsel %vm101, %v217, 0.0
    %220 = vadd.xlane.f32.xlu0 %v219
    %v221 = vpop.xlane.xlu0 %220
    %v222 = vsel %vm101, %v218, 0.0
    %223 = vadd.xlane.f32.xlu0 %v222
    %v224 = vpop.xlane.xlu0 %223
    %v225 = vld [vmem:[%s3] sm:$0x3]
    %vm226 = vcmp.ne.s32.totalorder %v225, 0
    %v229 = vlaneseq
    %v230 = vand.u32 %v229, 127
    %v231 = vlaneseq
    %v232 = vshrl.u32 %v231, 7
    %v233 = vsub.s32 %v230, %v232
    %v234 = vrot.slane %v221, %v233
    %v235 = vlaneseq
    %v236 = vshrl.u32 %v235, 7
    %v237 = vsub.s32 %v230, %v236
    %v238 = vrot.slane %v224, %v237
    %vm239 = vcmask 1041409
    %v240 = vsel %vm239, %v238, %v234
    %v242 = vsel %vm226, %v240, -1e+20
    %vm243 = vcmask 58368
    %244 = vst.msk [vmem:[#allocation16] sm:$0x3] %vm243, %v242
    %v245 = vld [vmem:[#allocation3] sm:$0x3]
    %v246 = vsel %vm243, %v242, -inf
    %247 = vmax.xlane.f32.xlu0 %v246
    %v248 = vpop.xlane.xlu0 %247
    %v249 = vmax.f32 %v245, %v248
    %v250 = vsub.f32 %v245, %v249
    %v251 = vmul.f32 %v250, 1.442695
    %v252 = vpow.pop %v251
    %254 = vset.pattern.permute.xlu0 0
    %255 = vperm.xlu0 %254, %v249
    %v256 = vpop.permute.xlu0 %255
    %v258 = vsub.f32 %v242, %v256
    %v259 = vmul.f32 %v258, 1.442695
    %v260 = vpow.pop %v259
    %v261 = vld [vmem:[#allocation4] sm:$0x3]
    %v262 = vmul.f32 %v252, %v261
    %v263 = vsel %vm243, %v260, 0.0
    %264 = vadd.xlane.f32.xlu0 %v263
    %v265 = vpop.xlane.xlu0 %264
    %v266 = vadd.f32 %v262, %v265
    %267 = vst.msk [vmem:[#allocation4] sm:$0x3] %vm177, %v266
    %v268 = vld [vmem:[#allocation5] sm:$0x3]
    %270 = vset.pattern.permute.xlu0 0
    %271 = vperm.xlu0 %270, %v252
    %v272 = vpop.permute.xlu0 %271
    %v274 = vmul.f32 %v272, %v268
    %v275 = vlaneseq
    %v276 = vshrl.u32 %v275, 7
    %v277 = vsub.s32 0, %v276
    %v278 = vrot.slane %v260, %v277
    %280 = vbcast.lane.b32.xlu0 %v278, 256
    %v281 = vpop.permute.xlu0 %280
    %v282 = vlaneseq
    %v283 = vshrl.u32 %v282, 7
    %v284 = vsub.s32 1, %v283
    %v285 = vrot.slane %v260, %v284
    %287 = vbcast.lane.b32.xlu0 %v285, 256
    %v288 = vpop.permute.xlu0 %287
    %v289 = vmul.f32 %v281, %v181
    %v290 = vmul.f32 %v288, %v182
    %v291 = vsel %vm101, %v289, 0.0
    %v292 = vrot.slane %v291, 4
    %v293 = vadd.f32 %v291, %v292
    %v294 = vrot.slane %v293, 2
    %v295 = vadd.f32 %v293, %v294
    %v296 = vrot.slane %v295, 1
    %v297 = vadd.f32 %v295, %v296
    %v298 = vsel %vm101, %v290, 0.0
    %v299 = vrot.slane %v298, 4
    %v300 = vadd.f32 %v298, %v299
    %v301 = vrot.slane %v300, 2
    %v302 = vadd.f32 %v300, %v301
    %v303 = vrot.slane %v302, 1
    %v304 = vadd.f32 %v302, %v303
    %v307 = vsel %vm239, %v304, %v297
    %v309 = vadd.f32 %v274, %v307
    %310 = vst.msk [vmem:[#allocation5] sm:$0x3] %vm175, %v309
    %311 = vst.msk [vmem:[#allocation3] sm:$0x3] %vm177, %v249
    %v312 = vld [vmem:[#allocation4] sm:$0x3]
    %v313 = vrcp.pop %v312
    %v314 = vld [vmem:[#allocation16] sm:$0x3]
    %v315 = vld [vmem:[#allocation3] sm:$0x3]
    %317 = vset.pattern.permute.xlu0 0
    %318 = vperm.xlu0 %317, %v315
    %v319 = vpop.permute.xlu0 %318
    %v321 = vsub.f32 %v314, %v319
    %v322 = vmul.f32 %v321, 1.442695
    %v323 = vpow.pop %v322
    %325 = vset.pattern.permute.xlu0 0
    %326 = vperm.xlu0 %325, %v313
    %v327 = vpop.permute.xlu0 %326
    %v329 = vmul.f32 %v323, %v327
    %330 = vst.msk [vmem:[#allocation16] sm:$0x3] %vm243, %v329
    %v331 = vld [vmem:[#allocation5] sm:$0x3]
    %v332 = vmul.f32 %v331, %v327
    %v333 = vld [vmem:[#allocation6] sm:$0x3]
    %v334 = vld [vmem:[#allocation12] sm:$0xff]
    %v335 = vld [vmem:[#allocation12 + $0x8] sm:$0xff]
    %v336 = vld [vmem:[#allocation12 + $0x10] sm:$0xff]
    %v337 = vld [vmem:[#allocation12 + $0x18] sm:$0xff]
    %v338 = vld [vmem:[#allocation14] sm:$0xff]
    %v339 = vld [vmem:[#allocation14 + $0x8] sm:$0xff]
    %v340 = vld [vmem:[#allocation14 + $0x10] sm:$0xff]
    %v341 = vld [vmem:[#allocation14 + $0x18] sm:$0xff]
    %v343 = vsel %vm101, %v332, 0
    %345 = vmatprep.subr.mxu0 0.0
    %346 = vmatpush1.msra.mxu0 %v338
    %347 = vmatprep.subr.mxu0 0.0
    %348 = vmatpush1.msra.mxu0 %v339
    %349 = vmatprep.subr.mxu0 0.0
    %350 = vmatpush1.msra.mxu0 %v340
    %351 = vmatprep.subr.mxu0 0.0
    %352 = vmatpush1.msra.mxu0 %v341
    %353 = vmatprep.subr.mxu0 0.0
    %354 = vmatpush1.msra.mxu0 0.0
    %355 = vmatprep.subr.mxu0 0.0
    %356 = vmatpush1.msra.mxu0 0.0
    %357 = vmatprep.subr.mxu0 0.0
    %358 = vmatpush1.msra.mxu0 0.0
    %359 = vmatprep.subr.mxu0 0.0
    %360 = vmatpush1.msra.mxu0 0.0
    %361 = vmatprep.subr.mxu0 0.0
    %362 = vmatpush1.msra.mxu0 0.0
    %363 = vmatprep.subr.mxu0 0.0
    %364 = vmatpush1.msra.mxu0 0.0
    %365 = vmatprep.subr.mxu0 0.0
    %366 = vmatpush1.msra.mxu0 0.0
    %367 = vmatprep.subr.mxu0 0.0
    %368 = vmatpush1.msra.mxu0 0.0
    %369 = vmatprep.subr.mxu0 0.0
    %370 = vmatpush1.msra.mxu0 0.0
    %371 = vmatprep.subr.mxu0 0.0
    %372 = vmatpush1.msra.mxu0 0.0
    %373 = vmatprep.subr.mxu0 0.0
    %374 = vmatpush1.msra.mxu0 0.0
    %375 = vmatprep.subr.mxu0 0.0
    %376 = vmatpush1.msra.mxu0 0.0
    %377 = vmatprep.subr.mxu0 0.0
    %378 = vmatpush1.msra.mxu0 0.0
    %379 = vmatprep.subr.mxu0 0.0
    %380 = vmatpush1.msra.mxu0 0.0
    %381 = vmatprep.subr.mxu0 0.0
    %382 = vmatpush1.msra.mxu0 0.0
    %383 = vmatprep.subr.mxu0 0.0
    %384 = vmatpush1.msra.mxu0 0.0
    %385 = vmatprep.subr.mxu0 0.0
    %386 = vmatpush1.msra.mxu0 0.0
    %387 = vmatprep.subr.mxu0 0.0
    %388 = vmatpush1.msra.mxu0 0.0
    %389 = vmatprep.subr.mxu0 0.0
    %390 = vmatpush1.msra.mxu0 0.0
    %391 = vmatprep.subr.mxu0 0.0
    %392 = vmatpush1.msra.mxu0 0.0
    %393 = vmatprep.subr.mxu0 0.0
    %394 = vmatpush1.msra.mxu0 0.0
    %395 = vmatprep.subr.mxu0 0.0
    %396 = vmatpush1.msra.mxu0 0.0
    %397 = vmatprep.subr.mxu0 0.0
    %398 = vmatpush1.msra.mxu0 0.0
    %399 = vmatprep.subr.mxu0 0.0
    %400 = vmatpush1.msra.mxu0 0.0
    %401 = vmatprep.subr.mxu0 0.0
    %402 = vmatpush1.msra.mxu0 0.0
    %403 = vmatprep.subr.mxu0 0.0
    %404 = vmatpush1.msra.mxu0 0.0
    %405 = vmatprep.subr.mxu0 0.0
    %406 = vmatpush1.msra.mxu0 0.0
    %407 = vmatprep.subr.mxu0 0.0
    %408 = vmatpush1.msra.mxu0 0.0
    %409 = vmatprep.mubr.f32.mxu0 0.0
    %410 = vmatmul.mubr.f32.gmra.mrb[0].mxu0 %v343
    %v411 = vpop.f32.mrb[0].mxu0
    %v412 = vadd.f32 0.0, %v411
    %v413 = vpop.f32.mrb[0].mxu0
    %414 = vdwg.mxu0
    %v416 = vsel %vm101, %v333, 0
    %418 = vmatprep.subr.mxu0 0.0
    %419 = vmatpush1.msra.mxu0 %v334
    %420 = vmatprep.subr.mxu0 0.0
    %421 = vmatpush1.msra.mxu0 %v335
    %422 = vmatprep.subr.mxu0 0.0
    %423 = vmatpush1.msra.mxu0 %v336
    %424 = vmatprep.subr.mxu0 0.0
    %425 = vmatpush1.msra.mxu0 %v337
    %426 = vmatprep.subr.mxu0 0.0
    %427 = vmatpush1.msra.mxu0 0.0
    %428 = vmatprep.subr.mxu0 0.0
    %429 = vmatpush1.msra.mxu0 0.0
    %430 = vmatprep.subr.mxu0 0.0
    %431 = vmatpush1.msra.mxu0 0.0
    %432 = vmatprep.subr.mxu0 0.0
    %433 = vmatpush1.msra.mxu0 0.0
    %434 = vmatprep.subr.mxu0 0.0
    %435 = vmatpush1.msra.mxu0 0.0
    %436 = vmatprep.subr.mxu0 0.0
    %437 = vmatpush1.msra.mxu0 0.0
    %438 = vmatprep.subr.mxu0 0.0
    %439 = vmatpush1.msra.mxu0 0.0
    %440 = vmatprep.subr.mxu0 0.0
    %441 = vmatpush1.msra.mxu0 0.0
    %442 = vmatprep.subr.mxu0 0.0
    %443 = vmatpush1.msra.mxu0 0.0
    %444 = vmatprep.subr.mxu0 0.0
    %445 = vmatpush1.msra.mxu0 0.0
    %446 = vmatprep.subr.mxu0 0.0
    %447 = vmatpush1.msra.mxu0 0.0
    %448 = vmatprep.subr.mxu0 0.0
    %449 = vmatpush1.msra.mxu0 0.0
    %450 = vmatprep.subr.mxu0 0.0
    %451 = vmatpush1.msra.mxu0 0.0
    %452 = vmatprep.subr.mxu0 0.0
    %453 = vmatpush1.msra.mxu0 0.0
    %454 = vmatprep.subr.mxu0 0.0
    %455 = vmatpush1.msra.mxu0 0.0
    %456 = vmatprep.subr.mxu0 0.0
    %457 = vmatpush1.msra.mxu0 0.0
    %458 = vmatprep.subr.mxu0 0.0
    %459 = vmatpush1.msra.mxu0 0.0
    %460 = vmatprep.subr.mxu0 0.0
    %461 = vmatpush1.msra.mxu0 0.0
    %462 = vmatprep.subr.mxu0 0.0
    %463 = vmatpush1.msra.mxu0 0.0
    %464 = vmatprep.subr.mxu0 0.0
    %465 = vmatpush1.msra.mxu0 0.0
    %466 = vmatprep.subr.mxu0 0.0
    %467 = vmatpush1.msra.mxu0 0.0
    %468 = vmatprep.subr.mxu0 0.0
    %469 = vmatpush1.msra.mxu0 0.0
    %470 = vmatprep.subr.mxu0 0.0
    %471 = vmatpush1.msra.mxu0 0.0
    %472 = vmatprep.subr.mxu0 0.0
    %473 = vmatpush1.msra.mxu0 0.0
    %474 = vmatprep.subr.mxu0 0.0
    %475 = vmatpush1.msra.mxu0 0.0
    %476 = vmatprep.subr.mxu0 0.0
    %477 = vmatpush1.msra.mxu0 0.0
    %478 = vmatprep.subr.mxu0 0.0
    %479 = vmatpush1.msra.mxu0 0.0
    %480 = vmatprep.subr.mxu0 0.0
    %481 = vmatpush1.msra.mxu0 0.0
    %482 = vmatprep.mubr.f32.mxu0 0.0
    %483 = vmatmul.mubr.f32.gmra.mrb[0].mxu0 %v416
    %v484 = vpop.f32.mrb[0].mxu0
    %v485 = vadd.f32 %v412, %v484
    %v486 = vpop.f32.mrb[0].mxu0
    %487 = vdwg.mxu0
    %v488 = vtanh.pop %v485
    %489 = vst.msk [vmem:[#allocation15] sm:$0x3] %vm175, %v488
    // Predicated region
    $region50: #{tpu_custom_call.1} parent=1 // pred_check
      _
    $region51: #{tpu_custom_call.1} parent=1 // pred_check_branch
      %491 = sbr.rel (0) target = $region53
    $region52: #{tpu_custom_call.1} parent=1 // pred_region
      %s493 = ssub.s32 32, 32
      %494 = vsyncadd [#allocation8], %s493
      %s496 = sshll.u32 [#allocation15], 4
      %s497 = int_to_ptr.vmem [resolvable:$true] %s496
      %499 = dma.vmem_to_hbm [thread:$0]  %s497, 32, %s7, [#allocation8]
    $region53: #{tpu_custom_call.1} parent=1 // pred_fallthru
      _
    // Predicated region
    $region54: #{tpu_custom_call.1} parent=1 // pred_check
      _
    $region55: #{tpu_custom_call.1} parent=1 // pred_check_branch
      %501 = sbr.rel (0) target = $region57
    $region56: #{tpu_custom_call.1} parent=1 // pred_region
      %s503 = ssub.s32 32, 32
      %504 = vsyncadd [#allocation17], %s503
      %s506 = sshll.u32 [#allocation16], 4
      %s507 = int_to_ptr.vmem [resolvable:$true] %s506
      %509 = dma.vmem_to_hbm [thread:$0]  %s507, 32, %s8, [#allocation17]
    $region57: #{tpu_custom_call.1} parent=1 // pred_fallthru
      _
    // Predicated region
    $region58: #{tpu_custom_call.1} parent=1 // pred_check
      _
    $region59: #{tpu_custom_call.1} parent=1 // pred_check_branch
      %511 = sbr.rel (0) target = $region61
    $region60: #{tpu_custom_call.1} parent=1 // pred_region
      %512 = dma.done [#allocation8], 32
    $region61: #{tpu_custom_call.1} parent=1 // pred_fallthru
      _
    // Predicated region
    $region62: #{tpu_custom_call.1} parent=1 // pred_check
      _
    $region63: #{tpu_custom_call.1} parent=1 // pred_check_branch
      %514 = sbr.rel (0) target = $region65
    $region64: #{tpu_custom_call.1} parent=1 // pred_region
      %515 = dma.done [#allocation17], 32
    $region65: #{tpu_custom_call.1} parent=1 // pred_fallthru
      _
    %516 = vsyncpa [#allocation7], 1
    %517 = vsyncpa [#allocation10], 1
    %518 = vsyncpa [#allocation13], 1
    %519 = vsyncpa [#allocation8], 1
    %520 = vsyncpa [#allocation17], 1

</llo_original>
